<compile_context>
chip_gen: v7x
topology: tpu7x:2x2x1
jax: 0.10.0
libtpu: 0.0.40
codegen_flags: <defaults>
</compile_context>

<pallas_src>
import functools

import jax
import jax.numpy as jnp
from jax.experimental import pallas as pl
from jax.experimental.pallas import tpu as pltpu

_LANES = 128
_SUBLANES = 8


def _sublane_multiple(dtype):
    itemsize = jnp.dtype(dtype).itemsize
    if itemsize >= 4:
        return 8
    if itemsize == 2:
        return 16
    return 32


def _detect_num_tensorcores(default=2):
    """Best-effort TensorCore count (2 on v7x-class chips, 1 on v5e/v6e)."""
    try:
        info = pltpu.get_tpu_info()
        for name in ("num_cores", "num_tensorcores", "tensorcore_count",
                     "core_count"):
            v = getattr(info, name, None)
            if isinstance(v, int) and v >= 1:
                return max(1, min(int(v), 8))
    except Exception:
        pass
    return default


def _elementwise_loss_f32(x, t, smoothing, pos_weight):
    """Per-element smoothed BCE-with-logits loss, computed in f32."""
    x = x.astype(jnp.float32)
    t = t.astype(jnp.float32) * (1.0 - smoothing) + 0.5 * smoothing
    # Numerically stable softplus(-x) = max(-x, 0) + log1p(exp(-|x|)).
    sp = jnp.maximum(-x, 0.0) + jnp.log1p(jnp.exp(-jnp.abs(x)))
    if pos_weight is None or float(pos_weight) == 1.0:
        return (1.0 - t) * x + sp
    pw = float(pos_weight)
    return (1.0 - t) * x + (1.0 + (pw - 1.0) * t) * sp


def _bce_ls_kernel(logits_ref, targets_ref, out_ref, *, smoothing, pos_weight,
                   block_rows):
    i = pl.program_id(1)   # sequential ("arbitrary") reduction axis

    @pl.when(i == 0)
    def _():
        out_ref[...] = jnp.zeros_like(out_ref)

    x = logits_ref[...].astype(jnp.float32)
    t = targets_ref[...].astype(jnp.float32)

    # Label smoothing (constants folded at trace time).
    t = t * (1.0 - smoothing) + (0.5 * smoothing)

    # Numerically stable softplus(-x) = max(-x, 0) + log1p(exp(-|x|)).
    softplus_neg_x = jnp.maximum(-x, 0.0) + jnp.log1p(jnp.exp(-jnp.abs(x)))

    if pos_weight is None or float(pos_weight) == 1.0:
        loss = (1.0 - t) * x + softplus_neg_x
    else:
        pw = float(pos_weight)
        loss = (1.0 - t) * x + (1.0 + (pw - 1.0) * t) * softplus_neg_x

    # Fold the (block_rows, 128) tile into one vreg-shaped (8, 128) partial sum
    # and accumulate straight into the resident output block (VPU adds only).
    folded = loss.reshape(block_rows // _SUBLANES, _SUBLANES, _LANES).sum(axis=0)
    out_ref[...] += folded[None]


def bce_with_logits_label_smoothing(logits, targets, *, smoothing=0.05,
                                    pos_weight=None, block_rows=4096,
                                    num_cores=None):
    """Mean-reduced BCEWithLogits with label smoothing, computed in Pallas.

    pos_weight: None or a Python scalar (folded at trace time).
    """
    # TODO(synk): per-class tensor pos_weight not supported; scalar / None only.
    assert logits.shape == targets.shape, (logits.shape, targets.shape)
    total_n = int(logits.size)
    assert total_n > 0, "empty input"
    smoothing = float(smoothing)

    if num_cores is None:
        num_cores = _detect_num_tensorcores(default=2)

    # Flatten: a contiguous reshape is a free bitcast, not a copy.
    lf = logits.reshape(-1)
    tf = targets.reshape(-1)

    sub = max(_sublane_multiple(logits.dtype), _sublane_multiple(targets.dtype))
    rows_full = total_n // _LANES          # number of complete 128-lane rows

    # Clamp the streaming block to the available full rows, rounded to the
    # native sublane packing of the storage dtype.
    if rows_full >= sub:
        br = min(int(block_rows), rows_full)
        br = max(sub, (br // sub) * sub)
    else:
        br = 0
    blocks_total = rows_full // br if br else 0
    if blocks_total < num_cores:
        num_cores = 1
    steps = blocks_total // num_cores if blocks_total else 0
    main_blocks = steps * num_cores
    main_rows = main_blocks * br
    main_n = main_rows * _LANES

    total_sum = jnp.zeros((), dtype=jnp.float32)

    if main_blocks > 0:
        if total_n % _LANES == 0:
            # Free bitcast view of the full flattened array; the grid only ever
            # touches the first `main_rows` rows. No HBM copies at all.
            logits2d = lf.reshape(rows_full, _LANES)
            targets2d = tf.reshape(rows_full, _LANES)
        else:
            # TODO(synk): a fully copy-free ragged path would need 1-D blocks or
            # manual DMA; this static prefix slice costs one extra read+write of
            # the prefix (but no per-element mask and no padded HBM stream).
            logits2d = lf[:main_n].reshape(main_rows, _LANES)
            targets2d = tf[:main_n].reshape(main_rows, _LANES)

        kernel = functools.partial(
            _bce_ls_kernel,
            smoothing=smoothing,
            pos_weight=pos_weight,
            block_rows=br,
        )

        def in_map(c, i):
            return (c * steps + i, 0)

        item_bytes = (jnp.dtype(logits.dtype).itemsize
                      + jnp.dtype(targets.dtype).itemsize)
        cost = pl.CostEstimate(
            flops=10 * main_n,
            transcendentals=2 * main_n,
            bytes_accessed=main_n * item_bytes
                           + num_cores * _SUBLANES * _LANES * 4,
        )

        # Double-buffered VMEM need for the two input streams; raise the scoped
        # limit only if a large (e.g. v7x 8192-row) block was requested.
        vmem_need = 2 * br * _LANES * item_bytes
        vmem_limit = None
        if vmem_need > 12 * 1024 * 1024:
            vmem_limit = int(min(128 * 1024 * 1024, 2 * vmem_need))

        partials = pl.pallas_call(
            kernel,
            out_shape=jax.ShapeDtypeStruct((num_cores, _SUBLANES, _LANES),
                                           jnp.float32),
            grid_spec=pltpu.PrefetchScalarGridSpec(
                num_scalar_prefetch=0,
                grid=(num_cores, steps),
                in_specs=[
                    pl.BlockSpec((br, _LANES), in_map),
                    pl.BlockSpec((br, _LANES), in_map),
                ],
                out_specs=pl.BlockSpec((1, _SUBLANES, _LANES),
                                       lambda c, i: (c, 0, 0)),
            ),
            compiler_params=pltpu.CompilerParams(
                dimension_semantics=("parallel", "arbitrary"),
                vmem_limit_bytes=vmem_limit,
            ),
            cost_estimate=cost,
        )(logits2d, targets2d)

        total_sum = jnp.sum(partials, dtype=jnp.float32)

    if main_n < total_n:
        # Sub-block tail (< one grid block): plain jnp on a tiny slice — no
        # padding, no mask, no extra full-array traffic.
        tail = _elementwise_loss_f32(lf[main_n:], tf[main_n:], smoothing,
                                     pos_weight)
        total_sum = total_sum + jnp.sum(tail, dtype=jnp.float32)

    # Exact 1/N scale (folded in Python f64) outside the kernel.
    return total_sum * (1.0 / float(total_n))


def _reference(logits, targets, smoothing=0.05, pos_weight=None):
    """Independent log-sigmoid formulation of torch's BCEWithLogits + smoothing."""
    x = logits.astype(jnp.float32)
    t = targets.astype(jnp.float32) * (1.0 - smoothing) + 0.5 * smoothing
    sp_neg = jnp.maximum(-x, 0.0) + jnp.log1p(jnp.exp(-jnp.abs(x)))  # softplus(-x)
    log_sig = -sp_neg
    log_one_minus_sig = -x - sp_neg
    pw = 1.0 if pos_weight is None else float(pos_weight)
    loss = -(pw * t * log_sig + (1.0 - t) * log_one_minus_sig)
    return jnp.mean(loss)


if __name__ == "__main__":
    key = jax.random.PRNGKey(0)
    k1, k2, k3, k4, k5, k6 = jax.random.split(key, 6)

    # 1) Small multi-label setup (batch=16, classes=128), f32, lane-aligned
    #    -> copy-free Pallas path, grid (1, 1).
    logits_a = jax.random.normal(k1, (16, 128), dtype=jnp.float32) * 2.0
    targets_a = (jax.random.uniform(k2, (16, 128)) > 0.5).astype(jnp.float32)
    out_a = jax.block_until_ready(
        bce_with_logits_label_smoothing(logits_a, targets_a, smoothing=0.05))
    ref_a = _reference(logits_a, targets_a, smoothing=0.05)
    assert jnp.allclose(out_a, ref_a, rtol=1e-5, atol=1e-6), (out_a, ref_a)

    # 2) Scalar pos_weight branch.
    out_b = jax.block_until_ready(
        bce_with_logits_label_smoothing(logits_a, targets_a, smoothing=0.05,
                                        pos_weight=2.0))
    ref_b = _reference(logits_a, targets_a, smoothing=0.05, pos_weight=2.0)
    assert jnp.allclose(out_b, ref_b, rtol=1e-5, atol=1e-6), (out_b, ref_b)

    # 3) Ragged, non-128-aligned bf16 (37, 300): Pallas prefix + jnp tail.
    logits_c = (jax.random.normal(k3, (37, 300), dtype=jnp.float32) * 2.0
                ).astype(jnp.bfloat16)
    targets_c = (jax.random.uniform(k4, (37, 300)) > 0.5).astype(jnp.bfloat16)
    out_c = jax.block_until_ready(
        bce_with_logits_label_smoothing(logits_c, targets_c, smoothing=0.05))
    ref_c = _reference(logits_c, targets_c, smoothing=0.05)
    assert jnp.allclose(out_c, ref_c, rtol=1e-4, atol=1e-4), (out_c, ref_c)

    # 4) Multi-core x multi-step grid (forced small block): grid (2, 2).
    logits_d = jax.random.normal(k5, (64, 256), dtype=jnp.float32)
    targets_d = (jax.random.uniform(k6, (64, 256)) > 0.5).astype(jnp.float32)
    out_d = jax.block_until_ready(
        bce_with_logits_label_smoothing(logits_d, targets_d, smoothing=0.05,
                                        block_rows=32, num_cores=2))
    ref_d = _reference(logits_d, targets_d, smoothing=0.05)
    assert jnp.allclose(out_d, ref_d, rtol=1e-5, atol=1e-6), (out_d, ref_d)

    print("KERNEL_OK")
</pallas_src>

<mosaic_0001>
module attributes {stable_mosaic.version = 11 : i64} {
  func.func @_bce_ls_kernel(%arg0: i32, %arg1: i32, %arg2: memref<16x128xf32, #tpu.memory_space<vmem>>, %arg3: memref<16x128xf32, #tpu.memory_space<vmem>>, %arg4: memref<1x8x128xf32, #tpu.memory_space<vmem>>) attributes {dimension_semantics = [#tpu.dimension_semantics<parallel>, #tpu.dimension_semantics<arbitrary>], iteration_bounds = array<i64: 1, 1>, scalar_prefetch = 0 : i64, scratch_operands = 0 : i64, tpu.core_type = #tpu.core_type<tc>, window_params = [{transform_indices = @transform_0, window_bounds = array<i64: 16, 128>}, {transform_indices = @transform_1, window_bounds = array<i64: 16, 128>}, {transform_indices = @transform_2, window_bounds = array<i64: 1, 8, 128>}]} {
    %c0_i32 = arith.constant 0 : i32
    %0 = arith.cmpi eq, %arg1, %c0_i32 : i32
    %1 = arith.extui %0 : i1 to i32
    %c0_i32_0 = arith.constant 0 : i32
    %2 = arith.cmpi ne, %1, %c0_i32_0 : i32
    scf.if %2 {
      %cst_16 = arith.constant 0.000000e+00 : f32
      %29 = vector.broadcast %cst_16 : f32 to vector<1x8x128xf32>
      %c0_17 = arith.constant 0 : index
      %c0_18 = arith.constant 0 : index
      %c0_19 = arith.constant 0 : index
      %30 = vector.load %arg4[%c0_17, %c0_18, %c0_19] : memref<1x8x128xf32, #tpu.memory_space<vmem>>, vector<1x8x128xf32>
      tpu.vector_store %arg4[%c0_17, %c0_18, %c0_19], %29 {strides = array<i32>} : memref<1x8x128xf32, #tpu.memory_space<vmem>>, vector<1x8x128xf32>,
    } else {
    }
    %c0 = arith.constant 0 : index
    %c0_1 = arith.constant 0 : index
    %3 = vector.load %arg2[%c0, %c0_1] : memref<16x128xf32, #tpu.memory_space<vmem>>, vector<16x128xf32>
    %c0_2 = arith.constant 0 : index
    %c0_3 = arith.constant 0 : index
    %4 = vector.load %arg3[%c0_2, %c0_3] : memref<16x128xf32, #tpu.memory_space<vmem>>, vector<16x128xf32>
    %cst = arith.constant 0.949999988 : f32
    %5 = vector.broadcast %cst : f32 to vector<16x128xf32>
    %6 = arith.mulf %4, %5 : vector<16x128xf32>
    %cst_4 = arith.constant 2.500000e-02 : f32
    %7 = vector.broadcast %cst_4 : f32 to vector<16x128xf32>
    %8 = arith.addf %6, %7 : vector<16x128xf32>
    %cst_5 = arith.constant 0.000000e+00 : f32
    %9 = vector.broadcast %cst_5 : f32 to vector<16x128xf32>
    %10 = arith.subf %9, %3 : vector<16x128xf32>
    %cst_6 = arith.constant 0.000000e+00 : f32
    %11 = vector.broadcast %cst_6 : f32 to vector<16x128xf32>
    %12 = arith.maximumf %10, %11 : vector<16x128xf32>
    %13 = math.absf %3 : vector<16x128xf32>
    %cst_7 = arith.constant 0.000000e+00 : f32
    %14 = vector.broadcast %cst_7 : f32 to vector<16x128xf32>
    %15 = arith.subf %14, %13 : vector<16x128xf32>
    %16 = math.exp %15 : vector<16x128xf32>
    %17 = math.log1p %16 : vector<16x128xf32>
    %18 = arith.addf %12, %17 : vector<16x128xf32>
    %cst_8 = arith.constant 1.000000e+00 : f32
    %19 = vector.broadcast %cst_8 : f32 to vector<16x128xf32>
    %20 = arith.subf %19, %8 : vector<16x128xf32>
    %21 = arith.mulf %20, %3 : vector<16x128xf32>
    %22 = arith.addf %21, %18 : vector<16x128xf32>
    %23 = vector.shape_cast %22 : vector<16x128xf32> to vector<2x8x128xf32>
    %cst_9 = arith.constant dense<0.000000e+00> : vector<8x128xf32>
    %24 = vector.multi_reduction <add>, %23, %cst_9 [0] : vector<2x8x128xf32> to vector<8x128xf32>
    %c0_10 = arith.constant 0 : index
    %c0_11 = arith.constant 0 : index
    %c0_12 = arith.constant 0 : index
    %25 = vector.load %arg4[%c0_10, %c0_11, %c0_12] : memref<1x8x128xf32, #tpu.memory_space<vmem>>, vector<1x8x128xf32>
    %26 = vector.shape_cast %24 : vector<8x128xf32> to vector<1x8x128xf32>
    %27 = arith.addf %25, %26 : vector<1x8x128xf32>
    %c0_13 = arith.constant 0 : index
    %c0_14 = arith.constant 0 : index
    %c0_15 = arith.constant 0 : index
    %28 = vector.load %arg4[%c0_13, %c0_14, %c0_15] : memref<1x8x128xf32, #tpu.memory_space<vmem>>, vector<1x8x128xf32>
    tpu.vector_store %arg4[%c0_13, %c0_14, %c0_15], %27 {strides = array<i32>} : memref<1x8x128xf32, #tpu.memory_space<vmem>>, vector<1x8x128xf32>,
    return
  }
  func.func @transform_0(%arg0: i32, %arg1: i32) -> (i32, i32) {
    %c1_i32 = arith.constant 1 : i32
    %0 = arith.muli %arg0, %c1_i32 : i32
    %1 = arith.addi %0, %arg1 : i32
    %c0_i32 = arith.constant 0 : i32
    %c0_i32_0 = arith.constant 0 : i32
    return %1, %c0_i32 : i32, i32
  }
  func.func @transform_1(%arg0: i32, %arg1: i32) -> (i32, i32) {
    %c1_i32 = arith.constant 1 : i32
    %0 = arith.muli %arg0, %c1_i32 : i32
    %1 = arith.addi %0, %arg1 : i32
    %c0_i32 = arith.constant 0 : i32
    %c0_i32_0 = arith.constant 0 : i32
    return %1, %c0_i32 : i32, i32
  }
  func.func @transform_2(%arg0: i32, %arg1: i32) -> (i32, i32, i32) {
    %c0_i32 = arith.constant 0 : i32
    %c0_i32_0 = arith.constant 0 : i32
    %c0_i32_1 = arith.constant 0 : i32
    return %arg0, %c0_i32, %c0_i32_0 : i32, i32, i32
  }
}

</mosaic_0001>

<llo_original>
// kernel: tpu_custom_call.1
$region0: #{tpu_custom_call.1}
  #allocation0 [shape = 'u32[]', space=smem, size = 0x4, offset = 0x4, fixed_abs, tag = 'smem constant byte address 0x4 - core index']
  #allocation1 [shape = 'u32[144,128]{1,0:T(1,128)}', space=vmem, size = 0x12000, scoped, tag = 'internal scratch']
  %s0 = inlined_call_operand.hbm [shape: f32[16,128], index: 0, kind: input, shape index: {}]
  %s1 = inlined_call_operand.hbm [shape: f32[16,128], index: 1, kind: input, shape index: {}]
  %s2 = inlined_call_operand.hbm [shape: f32[1,8,128], index: 2, kind: output, shape index: {}]
  %s3 = sld [smem:[#allocation0]]
  $region30: #{tpu_custom_call.1} parent=0
    _
  %s5 = ssub.s32 1, %s3
  %s6 = scalar_select 0, %s5, %s3
  $region1: #{tpu_custom_call.1} parent=0
    #allocation2 [shape = 'u8[8192]{0}', space=vmem, size = 0x2000, scoped, tag = 'input window, operand 0, single buffered']
    #allocation3 [shape = 's32[1]{0}', space=sflag, size = 0x4, scoped, tag = 'scoped memory for tpu_custom_call.1']
    #allocation4 [shape = 's32[1]{0}', space=sflag, size = 0x4, scoped, tag = 'scoped memory for tpu_custom_call.1']
    #allocation5 [shape = 'u8[8192]{0}', space=vmem, size = 0x2000, scoped, tag = 'input window, operand 1, single buffered']
    #allocation6 [shape = 's32[1]{0}', space=sflag, size = 0x4, scoped, tag = 'scoped memory for tpu_custom_call.1']
    #allocation7 [shape = 'u8[4096]{0}', space=vmem, size = 0x1000, scoped, tag = 'output window, operand 0, single buffered']
    %7 = vsyncpa [#allocation3], 0
    %8 = vsyncpa [#allocation6], 0
    %9 = vsyncpa [#allocation4], 0
    // Predicated region
    $region2: #{tpu_custom_call.1} parent=1 // pred_check
      _
    $region3: #{tpu_custom_call.1} parent=1 // pred_check_branch
      %11 = sbr.rel (0) target = $region5
    $region4: #{tpu_custom_call.1} parent=1 // pred_region
      %s12 = sadd.s32 0, 0
      %s13 = smul.u32 2, %s12
      %s15 = ssub.s32 256, 256
      %16 = vsyncadd [#allocation3], %s15
      %s17 = smul.addr %s13, 128
      %s18 = scalar_lea.hbm %s0, %s17
      %s19 = sshll.u32 [#allocation2], 4
      %s20 = int_to_ptr.vmem [resolvable:$true] %s19
      %25 = dma.hbm_to_vmem [thread:$0]  %s18, 256, %s20, [#allocation3], 128, 128, 8
    $region5: #{tpu_custom_call.1} parent=1 // pred_fallthru
      _
    // Predicated region
    $region6: #{tpu_custom_call.1} parent=1 // pred_check
      _
    $region7: #{tpu_custom_call.1} parent=1 // pred_check_branch
      %27 = sbr.rel (0) target = $region9
    $region8: #{tpu_custom_call.1} parent=1 // pred_region
      %s28 = sadd.s32 0, 0
      %s29 = smul.u32 2, %s28
      %s31 = ssub.s32 256, 256
      %32 = vsyncadd [#allocation6], %s31
      %s33 = smul.addr %s29, 128
      %s34 = scalar_lea.hbm %s1, %s33
      %s35 = sshll.u32 [#allocation5], 4
      %s36 = int_to_ptr.vmem [resolvable:$true] %s35
      %41 = dma.hbm_to_vmem [thread:$0]  %s34, 256, %s36, [#allocation6], 128, 128, 8
    $region9: #{tpu_custom_call.1} parent=1 // pred_fallthru
      _
    // Predicated region
    $region10: #{tpu_custom_call.1} parent=1 // pred_check
      _
    $region11: #{tpu_custom_call.1} parent=1 // pred_check_branch
      %43 = sbr.rel (0) target = $region13
    $region12: #{tpu_custom_call.1} parent=1 // pred_region
      %44 = dma.done [#allocation3], 256
    $region13: #{tpu_custom_call.1} parent=1 // pred_fallthru
      _
    // Predicated region
    $region14: #{tpu_custom_call.1} parent=1 // pred_check
      _
    $region15: #{tpu_custom_call.1} parent=1 // pred_check_branch
      %46 = sbr.rel (0) target = $region17
    $region16: #{tpu_custom_call.1} parent=1 // pred_region
      %47 = dma.done [#allocation6], 256
    $region17: #{tpu_custom_call.1} parent=1 // pred_fallthru
      _
    %s48 = sadd.s32 0, 0
    %s49 = smul.u32 2, %s48
    %s50 = sadd.s32 0, 0
    %s51 = smul.u32 2, %s50
    %p52 = scmp.eq.s32.totalorder 0, 0
    // Predicated region
    $region18: #{tpu_custom_call.1} parent=1 // pred_check
      %p53 = pneg %p52
    $region19: #{tpu_custom_call.1} parent=1 // pred_check_branch
      %55 = sbr.rel (%p53) target = $region21
    $region20: #{tpu_custom_call.1} parent=1 // pred_region
      %56 = vst [vmem:[#allocation7] sm:$0xff] 0.0
    $region21: #{tpu_custom_call.1} parent=1 // pred_fallthru
      _
    %v57 = vld [vmem:[#allocation2] sm:$0xff]
    %v58 = vld [vmem:[#allocation2 + $0x8] sm:$0xff]
    %v59 = vld [vmem:[#allocation5] sm:$0xff]
    %v60 = vld [vmem:[#allocation5 + $0x8] sm:$0xff]
    %v61 = vmul.f32 %v59, 0.95
    %v62 = vmul.f32 %v60, 0.95
    %v63 = vadd.f32 %v61, 0.025
    %v64 = vadd.f32 %v62, 0.025
    %v65 = vsub.f32 0.0, %v57
    %v66 = vsub.f32 0.0, %v58
    %v67 = vmax.f32 %v65, 0.0
    %v68 = vmax.f32 %v66, 0.0
    %v69 = vand.u32 2147483647, %v57
    %v70 = vand.u32 2147483647, %v58
    %v71 = vsub.f32 0.0, %v69
    %v72 = vsub.f32 0.0, %v70
    %v73 = vmul.f32 %v71, 1.442695
    %v74 = vpow.pop %v73
    %v75 = vmul.f32 %v72, 1.442695
    %v76 = vpow.pop %v75
    %v77 = vadd.f32 %v74, 1.0
    %v78 = vlog2.pop %v77
    %v79 = vmul.f32 %v78, 0.6931472
    %v80 = vmul.f32 -0.5, %v74
    %v81 = vadd.f32 %v80, 1.0
    %v82 = vmul.f32 %v81, %v74
    %v83 = vand.u32 2147483647, %v74
    %vm84 = vcmp.lt.f32.partialorder %v83, 0.0004427343
    %v85 = vsel %vm84, %v82, %v79
    %v86 = vadd.f32 %v76, 1.0
    %v87 = vlog2.pop %v86
    %v88 = vmul.f32 %v87, 0.6931472
    %v89 = vmul.f32 -0.5, %v76
    %v90 = vadd.f32 %v89, 1.0
    %v91 = vmul.f32 %v90, %v76
    %v92 = vand.u32 2147483647, %v76
    %vm93 = vcmp.lt.f32.partialorder %v92, 0.0004427343
    %v94 = vsel %vm93, %v91, %v88
    %v95 = vadd.f32 %v67, %v85
    %v96 = vadd.f32 %v68, %v94
    %v97 = vsub.f32 1.0, %v63
    %v98 = vsub.f32 1.0, %v64
    %v99 = vmul.f32 %v97, %v57
    %v100 = vmul.f32 %v98, %v58
    %v101 = vadd.f32 %v99, %v95
    %v102 = vadd.f32 %v100, %v96
    %v103 = vadd.f32 %v101, %v102
    %v104 = vld [vmem:[#allocation7] sm:$0xff]
    %v105 = vadd.f32 %v104, %v103
    %106 = vst [vmem:[#allocation7] sm:$0xff] %v105
    // Predicated region
    $region22: #{tpu_custom_call.1} parent=1 // pred_check
      _
    $region23: #{tpu_custom_call.1} parent=1 // pred_check_branch
      %108 = sbr.rel (0) target = $region25
    $region24: #{tpu_custom_call.1} parent=1 // pred_region
      %s110 = ssub.s32 128, 128
      %111 = vsyncadd [#allocation4], %s110
      %s113 = sshll.u32 [#allocation7], 4
      %s114 = int_to_ptr.vmem [resolvable:$true] %s113
      %116 = dma.vmem_to_hbm [thread:$0]  %s114, 128, %s2, [#allocation4]
    $region25: #{tpu_custom_call.1} parent=1 // pred_fallthru
      _
    // Predicated region
    $region26: #{tpu_custom_call.1} parent=1 // pred_check
      _
    $region27: #{tpu_custom_call.1} parent=1 // pred_check_branch
      %118 = sbr.rel (0) target = $region29
    $region28: #{tpu_custom_call.1} parent=1 // pred_region
      %119 = dma.done [#allocation4], 128
    $region29: #{tpu_custom_call.1} parent=1 // pred_fallthru
      _
    %120 = vsyncpa [#allocation3], 1
    %121 = vsyncpa [#allocation6], 1
    %122 = vsyncpa [#allocation4], 1

</llo_original>
